<compile_context>
chip_gen: v6e
topology: v6e:2x2x1
jax: 0.10.0
libtpu: 0.0.40
codegen_flags: <defaults>
</compile_context>

<pallas_src>
import functools

import jax
import jax.numpy as jnp
from jax.experimental import pallas as pl
from jax.experimental.pallas import tpu as pltpu


def _round_up(x, m):
    return ((x + m - 1) // m) * m


def _sublane_multiple(dtype):
    # 8 sublanes of 32-bit words per vreg tile; sub-32-bit dtypes pack along sublanes.
    return max(8, 32 // jnp.dtype(dtype).itemsize)


def _quan_linear_kernel(x_ref, w_ref, b_ref, s_ref, o_ref, acc_ref, *,
                        x_resident, tk):
    """One (tm, tn) output tile, accumulated over the K grid axis (axis 2)."""
    k = pl.program_id(2)

    @pl.when(k == 0)
    def _init():
        acc_ref[...] = jnp.zeros_like(acc_ref)

    if x_resident:
        # x panel is K-resident in VMEM; take the current 128-aligned K slice.
        ks = pl.multiple_of(k * tk, tk)
        x_blk = x_ref[:, pl.ds(ks, tk)]
    else:
        x_blk = x_ref[...]

    w_blk = w_ref[...]
    if w_blk.dtype != x_blk.dtype:
        # int8-stored quantized levels -> compute dtype (VPU cast, hidden under
        # MXU time).  The global dequant scale is applied once in the epilogue.
        w_blk = w_blk.astype(x_blk.dtype)

    acc_ref[...] += jnp.dot(x_blk, w_blk, preferred_element_type=jnp.float32)

    @pl.when(k == pl.num_programs(2) - 1)
    def _finalize():
        # Dequant scale + bias applied once; lane-dense store.
        o_ref[...] = (acc_ref[...] * s_ref[0] + b_ref[...]).astype(o_ref.dtype)


def quantize_pack_weight(weight, bits, *, tn=512, tk=512,
                         compute_dtype=jnp.bfloat16, store_int8=None):
    """Quantize + transpose + pad the (out, in) weight once (cache per layer).

    Global symmetric uniform quantizer: step = max|W| / (2^(bits-1) - 1),
    levels = clip(round(W / step), -half, +half).  For bits <= 8 the integer
    levels are stored as int8 (scale applied in the kernel epilogue); otherwise
    the dequantized weight is stored in compute_dtype with scale = 1.

    Returns (w_kn, scale, N, K, tn, tk): w_kn is (Kp, Np), pre-transposed to
    (K, N) layout and zero-padded to the tile grid.
    """
    N, K = weight.shape
    tn = _round_up(min(tn, _round_up(N, 128)), 128)
    tk = _round_up(min(tk, _round_up(K, 128)), 128)
    Np, Kp = _round_up(N, tn), _round_up(K, tk)

    half_lvls = (2.0 ** (bits - 1)) - 1.0
    w32 = weight.astype(jnp.float32)
    step = jnp.max(jnp.abs(w32)) / half_lvls
    step = jnp.where(step > 0, step, jnp.float32(1.0))   # all-zero-weight guard
    q = jnp.clip(jnp.round(w32 / step), -half_lvls, half_lvls)

    if store_int8 is None:
        store_int8 = bits <= 8
    if store_int8:
        w_store = q.astype(jnp.int8)                      # integer levels
        scale = step.reshape(1).astype(jnp.float32)       # dequant in epilogue
    else:
        w_store = (q * step).astype(compute_dtype)        # scale folded in
        scale = jnp.ones((1,), jnp.float32)

    w_kn = w_store.T                                      # (K, N)
    if (Kp - K) or (Np - N):
        w_kn = jnp.pad(w_kn, ((0, Kp - K), (0, Np - N)))
    return w_kn, scale, N, K, tn, tk


def quan_linear_fi(x, weight=None, bias=None, *, ber, bits,
                   tm=512, tn=512, tk=512,
                   compute_dtype=jnp.bfloat16, out_dtype=None,
                   x_resident_bytes=4 * 1024 * 1024,
                   packed_weight=None):
    """quan_Linear_fi forward (ber == 0 path).

    x:      (batch, seq, in_features)
    weight: (out_features, in_features)  PyTorch layout (ignored if packed_weight given)
    bias:   (out_features,) or None
    Returns (batch, seq, out_features) in out_dtype (default: x.dtype).
    """
    # TODO(synk): ber > 0 stochastic bit-flip injection (operation_mulfi /
    # operation_fi) is not implemented; with ber == 0 those ops are identities.
    del ber

    batch, seq, in_features = x.shape
    M = batch * seq
    out_dtype = x.dtype if out_dtype is None else out_dtype

    if packed_weight is None:
        packed_weight = quantize_pack_weight(weight, bits, tn=tn, tk=tk,
                                             compute_dtype=compute_dtype)
    w2, scale, N, K, tn, tk = packed_weight
    assert K == in_features, (K, in_features)
    Kp, Np = w2.shape

    # ---- tile sizes: sublane-aligned tm, lane-dense tn ----------------------
    sub = _sublane_multiple(compute_dtype)
    tm = _round_up(min(tm, _round_up(M, sub)), sub)
    Mp = _round_up(M, tm)

    # Give both TensorCores (v7x megacore) work when the natural (i, j) grid
    # would collapse to a single tile.
    if (Mp // tm) * (Np // tn) == 1 and Np % 256 == 0:
        tn = Np // 2

    grid = (Mp // tm, Np // tn, Kp // tk)

    # ---- activations / bias: cast + pad only when needed ---------------------
    x2 = x.reshape(M, K)
    if x2.dtype != compute_dtype:
        x2 = x2.astype(compute_dtype)
    if (Mp - M) or (Kp - K):
        x2 = jnp.pad(x2, ((0, Mp - M), (0, Kp - K)))

    if bias is None:
        b2 = jnp.zeros((Np,), jnp.float32)
    else:
        b2 = bias.astype(jnp.float32)
        if Np - N:
            b2 = jnp.pad(b2, (0, Np - N))
    b2 = b2.reshape(1, Np)

    # ---- keep the x row-panel K-resident when it is small enough -------------
    cbytes = jnp.dtype(compute_dtype).itemsize
    x_resident = tm * Kp * cbytes <= x_resident_bytes
    if x_resident:
        x_spec = pl.BlockSpec((tm, Kp), lambda i, j, k: (i, 0))
    else:
        x_spec = pl.BlockSpec((tm, tk), lambda i, j, k: (i, k))

    # ---- VMEM working-set estimate (double-buffered ins/outs + f32 acc) ------
    wbytes = jnp.dtype(w2.dtype).itemsize
    obytes = jnp.dtype(out_dtype).itemsize
    est_vmem = (2 * tm * (Kp if x_resident else tk) * cbytes
                + 2 * tk * tn * wbytes + 2 * tn * 4
                + 2 * tm * tn * obytes + tm * tn * 4)
    cp_kwargs = dict(dimension_semantics=("parallel", "parallel", "arbitrary"))
    if est_vmem > 32 * 1024 * 1024:
        # Stay within v7x's 64 MiB physical per-TensorCore VMEM.
        cp_kwargs["vmem_limit_bytes"] = int(min(est_vmem * 3 // 2,
                                                64 * 1024 * 1024))

    cost = pl.CostEstimate(
        flops=2 * M * N * K,
        transcendentals=0,
        bytes_accessed=(x2.size * cbytes + w2.size * wbytes
                        + b2.size * 4 + Mp * Np * obytes))

    kernel = functools.partial(_quan_linear_kernel, x_resident=x_resident, tk=tk)

    y = pl.pallas_call(
        kernel,
        out_shape=jax.ShapeDtypeStruct((Mp, Np), out_dtype),
        grid_spec=pltpu.PrefetchScalarGridSpec(
            num_scalar_prefetch=0,
            grid=grid,
            in_specs=[
                x_spec,                                              # x panel / block
                pl.BlockSpec((tk, tn), lambda i, j, k: (k, j)),      # weight stream
                pl.BlockSpec((1, tn), lambda i, j, k: (0, j)),       # bias (epilogue)
                pl.BlockSpec(memory_space=pltpu.MemorySpace.SMEM),   # dequant scale
            ],
            out_specs=pl.BlockSpec((tm, tn), lambda i, j, k: (i, j)),
            scratch_shapes=[pltpu.VMEM((tm, tn), jnp.float32)],
        ),
        compiler_params=pltpu.CompilerParams(**cp_kwargs),
        cost_estimate=cost,
    )(x2, w2, b2, scale)

    return y[:M, :N].reshape(batch, seq, N)


def reference_jax(x, weight, bias, bits):
    """Pure-JAX reference of the (ber == 0) forward."""
    half_lvls = (2.0 ** (bits - 1)) - 1.0
    step = jnp.max(jnp.abs(weight)) / half_lvls
    step = jnp.where(step > 0, step, jnp.float32(1.0))
    w_q = jnp.clip(jnp.round(weight / step), -half_lvls, half_lvls) * step
    y = jnp.einsum("bsk,ok->bso", x, w_q)
    if bias is not None:
        y = y + bias[None, None, :]
    return y


if __name__ == "__main__":
    key = jax.random.PRNGKey(0)
    kx, kw, kb, kx2, kw2, kb2 = jax.random.split(key, 6)
    bits, ber = 8, 0.0

    # --- small shapes implied by the module: x is (batch, seq, in_features) ---
    batch, seq, in_f, out_f = 2, 8, 32, 16
    x = jax.random.normal(kx, (batch, seq, in_f), dtype=jnp.float32)
    w = jax.random.normal(kw, (out_f, in_f), dtype=jnp.float32) * 0.1
    b = jax.random.normal(kb, (out_f,), dtype=jnp.float32) * 0.1
    y_ref = reference_jax(x, w, b, bits)

    # Exact path: f32 operands (int8-stored weight, scale in epilogue).
    y = jax.block_until_ready(
        quan_linear_fi(x, w, b, ber=ber, bits=bits, compute_dtype=jnp.float32))
    assert y.shape == (batch, seq, out_f)
    assert jnp.allclose(y, y_ref, atol=1e-5, rtol=1e-5)

    # Default fast path: bf16 operands, f32 accumulation, int8 weight storage.
    y_bf = jax.block_until_ready(quan_linear_fi(x, w, b, ber=ber, bits=bits))
    assert jnp.allclose(y_bf, y_ref, atol=0.1, rtol=0.05)

    # Multi-tile config: unaligned K/N, cached packed weight, K-resident x panel,
    # and the streamed (non-resident) x fallback path.
    b3, s3, in3, out3 = 2, 64, 500, 200
    x3 = jax.random.normal(kx2, (b3, s3, in3), dtype=jnp.float32)
    w3 = jax.random.normal(kw2, (out3, in3), dtype=jnp.float32) * 0.05
    bias3 = jax.random.normal(kb2, (out3,), dtype=jnp.float32) * 0.1
    y3_ref = reference_jax(x3, w3, bias3, bits)

    packed = quantize_pack_weight(w3, bits, tn=128, tk=128)   # hoisted / cached
    y3 = jax.block_until_ready(
        quan_linear_fi(x3, bias=bias3, ber=ber, bits=bits, tm=64,
                       packed_weight=packed))
    rel = float(jnp.max(jnp.abs(y3 - y3_ref)) / (jnp.max(jnp.abs(y3_ref)) + 1e-6))
    assert y3.shape == y3_ref.shape and rel < 0.03, rel

    y3s = jax.block_until_ready(
        quan_linear_fi(x3, bias=bias3, ber=ber, bits=bits, tm=64,
                       packed_weight=packed, x_resident_bytes=0))
    assert jnp.allclose(y3s, y3, atol=1e-3, rtol=1e-3)

    print("KERNEL_OK")
</pallas_src>

<mosaic_0001>
module attributes {stable_mosaic.version = 11 : i64} {
  func.func @_quan_linear_kernel(%arg0: i32, %arg1: i32, %arg2: i32, %arg3: memref<16x128xf32, #tpu.memory_space<vmem>>, %arg4: memref<128x128xi8, #tpu.memory_space<vmem>>, %arg5: memref<1x128xf32, #tpu.memory_space<vmem>>, %arg6: memref<1xf32, #tpu.memory_space<smem>>, %arg7: memref<16x128xf32, #tpu.memory_space<vmem>>, %arg8: memref<16x128xf32, #tpu.memory_space<vmem>>) attributes {dimension_semantics = [#tpu.dimension_semantics<parallel>, #tpu.dimension_semantics<parallel>, #tpu.dimension_semantics<arbitrary>], iteration_bounds = array<i64: 1, 1, 1>, scalar_prefetch = 0 : i64, scratch_operands = 1 : i64, tpu.core_type = #tpu.core_type<tc>, window_params = [{transform_indices = @transform_0, window_bounds = array<i64: 16, 128>}, {transform_indices = @transform_1, window_bounds = array<i64: 128, 128>}, {transform_indices = @transform_2, window_bounds = array<i64: 1, 128>}, {transform_indices = @transform_3, window_bounds = array<i64: 1>}, {transform_indices = @transform_4, window_bounds = array<i64: 16, 128>}]} {
    %c0_i32 = arith.constant 0 : i32
    %0 = arith.cmpi eq, %arg2, %c0_i32 : i32
    %1 = arith.extui %0 : i1 to i32
    %c0_i32_0 = arith.constant 0 : i32
    %2 = arith.cmpi ne, %1, %c0_i32_0 : i32
    scf.if %2 {
      %cst_9 = arith.constant 0.000000e+00 : f32
      %16 = vector.broadcast %cst_9 : f32 to vector<16x128xf32>
      %c0_10 = arith.constant 0 : index
      %c0_11 = arith.constant 0 : index
      %17 = vector.load %arg8[%c0_10, %c0_11] : memref<16x128xf32, #tpu.memory_space<vmem>>, vector<16x128xf32>
      tpu.vector_store %arg8[%c0_10, %c0_11], %16 {strides = array<i32>} : memref<16x128xf32, #tpu.memory_space<vmem>>, vector<16x128xf32>,
    } else {
    }
    %c128_i32 = arith.constant 128 : i32
    %3 = arith.muli %arg2, %c128_i32 : i32
    %4 = tpu.assume_multiple %3, 128 : i32
    %c0 = arith.constant 0 : index
    %5 = arith.index_cast %4 : i32 to index
    %6 = vector.load %arg3[%c0, %5] : memref<16x128xf32, #tpu.memory_space<vmem>>, vector<16x128xf32>
    %c0_1 = arith.constant 0 : index
    %c0_2 = arith.constant 0 : index
    %7 = vector.load %arg4[%c0_1, %c0_2] : memref<128x128xi8, #tpu.memory_space<vmem>>, vector<128x128xi8>
    %8 = arith.sitofp %7 : vector<128x128xi8> to vector<128x128xf32>
    %c0_3 = arith.constant 0 : index
    %c0_4 = arith.constant 0 : index
    %9 = vector.load %arg8[%c0_3, %c0_4] : memref<16x128xf32, #tpu.memory_space<vmem>>, vector<16x128xf32>
    %cst = arith.constant dense<0.000000e+00> : vector<16x128xf32>
    %10 = tpu.matmul %6, %8, %cst {dimension_numbers = #tpu.dot_dimension_numbers<[1], [0], [0], [1], [0, 0, 1, 1], [], []>} : vector<16x128xf32>, vector<128x128xf32>, vector<16x128xf32> -> vector<16x128xf32>
    %11 = arith.addf %9, %10 : vector<16x128xf32>
    %c0_5 = arith.constant 0 : index
    %c0_6 = arith.constant 0 : index
    %12 = vector.load %arg8[%c0_5, %c0_6] : memref<16x128xf32, #tpu.memory_space<vmem>>, vector<16x128xf32>
    tpu.vector_store %arg8[%c0_5, %c0_6], %11 {strides = array<i32>} : memref<16x128xf32, #tpu.memory_space<vmem>>, vector<16x128xf32>,
    %c0_i32_7 = arith.constant 0 : i32
    %13 = arith.cmpi eq, %arg2, %c0_i32_7 : i32
    %14 = arith.extui %13 : i1 to i32
    %c0_i32_8 = arith.constant 0 : i32
    %15 = arith.cmpi ne, %14, %c0_i32_8 : i32
    scf.if %15 {
      %c0_9 = arith.constant 0 : index
      %c0_10 = arith.constant 0 : index
      %16 = vector.load %arg8[%c0_9, %c0_10] : memref<16x128xf32, #tpu.memory_space<vmem>>, vector<16x128xf32>
      %c0_11 = arith.constant 0 : index
      %17 = memref.load %arg6[%c0_11] : memref<1xf32, #tpu.memory_space<smem>>
      %18 = vector.broadcast %17 : f32 to vector<16x128xf32>
      %19 = arith.mulf %16, %18 : vector<16x128xf32>
      %c0_12 = arith.constant 0 : index
      %c0_13 = arith.constant 0 : index
      %20 = vector.load %arg5[%c0_12, %c0_13] : memref<1x128xf32, #tpu.memory_space<vmem>>, vector<1x128xf32>
      %21 = vector.broadcast %20 : vector<1x128xf32> to vector<16x128xf32>
      %22 = arith.addf %19, %21 : vector<16x128xf32>
      %c0_14 = arith.constant 0 : index
      %c0_15 = arith.constant 0 : index
      %23 = vector.load %arg7[%c0_14, %c0_15] : memref<16x128xf32, #tpu.memory_space<vmem>>, vector<16x128xf32>
      tpu.vector_store %arg7[%c0_14, %c0_15], %22 {strides = array<i32>} : memref<16x128xf32, #tpu.memory_space<vmem>>, vector<16x128xf32>,
    } else {
    }
    return
  }
  func.func @transform_0(%arg0: i32, %arg1: i32, %arg2: i32) -> (i32, i32) {
    %c0_i32 = arith.constant 0 : i32
    %c0_i32_0 = arith.constant 0 : i32
    return %arg0, %c0_i32 : i32, i32
  }
  func.func @transform_1(%arg0: i32, %arg1: i32, %arg2: i32) -> (i32, i32) {
    %c0_i32 = arith.constant 0 : i32
    return %arg2, %arg1 : i32, i32
  }
  func.func @transform_2(%arg0: i32, %arg1: i32, %arg2: i32) -> (i32, i32) {
    %c0_i32 = arith.constant 0 : i32
    %c0_i32_0 = arith.constant 0 : i32
    return %c0_i32, %arg1 : i32, i32
  }
  func.func @transform_3(%arg0: i32, %arg1: i32, %arg2: i32) -> i32 {
    %c0_i32 = arith.constant 0 : i32
    %c0_i32_0 = arith.constant 0 : i32
    return %c0_i32 : i32
  }
  func.func @transform_4(%arg0: i32, %arg1: i32, %arg2: i32) -> (i32, i32) {
    %c0_i32 = arith.constant 0 : i32
    return %arg0, %arg1 : i32, i32
  }
}

</mosaic_0001>

<llo_original>
// kernel: tpu_custom_call.1
$region0: #{tpu_custom_call.1}
  #allocation0 [shape = 'u32[]', space=smem, size = 0x4, offset = 0x4, fixed_abs, tag = 'smem constant byte address 0x4 - core index']
  #allocation1 [shape = 'u32[144,128]{1,0:T(1,128)}', space=vmem, size = 0x12000, scoped, tag = 'internal scratch']
  #allocation2 [shape = 'f32[16,128]{1,0:T(8,128)}', space=vmem, size = 0x2000, scoped, tag = 'scratch operand']
  #allocation3 [shape = 'f32[1]{0:T(128)S(6)}', space=smem, size = 0x200, scoped, tag = 'scoped memory for tpu_custom_call.1']
  %s0 = inlined_call_operand.hbm [shape: f32[16,128], index: 0, kind: input, shape index: {}]
  %s1 = inlined_call_operand.hbm [shape: s8[128,128], index: 1, kind: input, shape index: {}]
  %s2 = inlined_call_operand.vmem [shape: f32[1,128], index: 2, kind: input, shape index: {}]
  %s3 = inlined_call_operand.<no memory space> [shape: f32[1], index: 3, kind: input, shape index: {}]
  %s4 = inlined_call_operand.hbm [shape: f32[16,128], index: 4, kind: output, shape index: {}]
  %s5 = sld [smem:[#allocation0]]
  $region42: #{tpu_custom_call.1} parent=0
    _
  %s7 = ssub.s32 1, %s5
  %s8 = scalar_select 0, %s7, %s5
  %9 = sst [smem:[#allocation3]] %s3
  $region1: #{tpu_custom_call.1} parent=0
    #allocation4 [shape = 'u8[8192]{0}', space=vmem, size = 0x2000, scoped, tag = 'input window, operand 0, single buffered']
    #allocation5 [shape = 's32[1]{0}', space=sflag, size = 0x4, scoped, tag = 'scoped memory for tpu_custom_call.1']
    #allocation6 [shape = 's32[1]{0}', space=sflag, size = 0x4, scoped, tag = 'scoped memory for tpu_custom_call.1']
    #allocation7 [shape = 'u8[16384]{0}', space=vmem, size = 0x4000, scoped, tag = 'input window, operand 1, single buffered']
    #allocation8 [shape = 's32[1]{0}', space=sflag, size = 0x4, scoped, tag = 'scoped memory for tpu_custom_call.1']
    #allocation9 [shape = 'u8[8192]{0}', space=vmem, size = 0x2000, scoped, tag = 'output window, operand 0, single buffered']
    %10 = vsyncpa [#allocation5], 0
    %11 = vsyncpa [#allocation8], 0
    %12 = vsyncpa [#allocation6], 0
    // Predicated region
    $region2: #{tpu_custom_call.1} parent=1 // pred_check
      _
    $region3: #{tpu_custom_call.1} parent=1 // pred_check_branch
      %14 = sbr.rel (0) target = $region5
    $region4: #{tpu_custom_call.1} parent=1 // pred_region
      %s16 = ssub.s32 256, 256
      %17 = vsyncadd [#allocation5], %s16
      %s18 = sshll.u32 [#allocation4], 4
      %s19 = int_to_ptr.vmem [resolvable:$true] %s18
      %24 = dma.hbm_to_vmem [thread:$0]  %s0, 256, %s19, [#allocation5], 128, 128, 8
    $region5: #{tpu_custom_call.1} parent=1 // pred_fallthru
      _
    // Predicated region
    $region6: #{tpu_custom_call.1} parent=1 // pred_check
      _
    $region7: #{tpu_custom_call.1} parent=1 // pred_check_branch
      %26 = sbr.rel (0) target = $region9
    $region8: #{tpu_custom_call.1} parent=1 // pred_region
      %s28 = ssub.s32 512, 512
      %29 = vsyncadd [#allocation8], %s28
      %s30 = sshll.u32 [#allocation7], 4
      %s31 = int_to_ptr.vmem [resolvable:$true] %s30
      %36 = dma.hbm_to_vmem [thread:$0]  %s1, 512, %s31, [#allocation8], 128, 128, 8
    $region9: #{tpu_custom_call.1} parent=1 // pred_fallthru
      _
    // Predicated region
    $region10: #{tpu_custom_call.1} parent=1 // pred_check
      _
    $region11: #{tpu_custom_call.1} parent=1 // pred_check_branch
      %38 = sbr.rel (0) target = $region13
    $region12: #{tpu_custom_call.1} parent=1 // pred_region
      _
    $region13: #{tpu_custom_call.1} parent=1 // pred_fallthru
      _
    // Predicated region
    $region14: #{tpu_custom_call.1} parent=1 // pred_check
      _
    $region15: #{tpu_custom_call.1} parent=1 // pred_check_branch
      %40 = sbr.rel (0) target = $region17
    $region16: #{tpu_custom_call.1} parent=1 // pred_region
      _
    $region17: #{tpu_custom_call.1} parent=1 // pred_fallthru
      _
    // Predicated region
    $region18: #{tpu_custom_call.1} parent=1 // pred_check
      _
    $region19: #{tpu_custom_call.1} parent=1 // pred_check_branch
      %42 = sbr.rel (0) target = $region21
    $region20: #{tpu_custom_call.1} parent=1 // pred_region
      %43 = dma.done [#allocation5], 256
    $region21: #{tpu_custom_call.1} parent=1 // pred_fallthru
      _
    // Predicated region
    $region22: #{tpu_custom_call.1} parent=1 // pred_check
      _
    $region23: #{tpu_custom_call.1} parent=1 // pred_check_branch
      %45 = sbr.rel (0) target = $region25
    $region24: #{tpu_custom_call.1} parent=1 // pred_region
      %46 = dma.done [#allocation8], 512
    $region25: #{tpu_custom_call.1} parent=1 // pred_fallthru
      _
    %p47 = scmp.eq.s32.totalorder 0, 0
    // Predicated region
    $region26: #{tpu_custom_call.1} parent=1 // pred_check
      %p48 = pneg %p47
    $region27: #{tpu_custom_call.1} parent=1 // pred_check_branch
      %50 = sbr.rel (%p48) target = $region29
    $region28: #{tpu_custom_call.1} parent=1 // pred_region
      %51 = vst [vmem:[#allocation2] sm:$0xff] 0.0
      %52 = vst [vmem:[#allocation2 + $0x8] sm:$0xff] 0.0
    $region29: #{tpu_custom_call.1} parent=1 // pred_fallthru
      _
    %s53 = smul.u32 0, 128
    %s54 = sshra.s32 %s53, 7
    %s55 = sand.u32 %s53, 127
    %s56 = scalar_lea.vmem [#allocation4], %s54
    %v57 = vld [vmem:[%s56] sm:$0xff]
    %v58 = vld [vmem:[%s56 + $0x8] sm:$0xff]
    %v59 = vld [vmem:[#allocation7] sm:$0xff]
    %v60 = vld [vmem:[#allocation7 + $0x8] sm:$0xff]
    %v61 = vld [vmem:[#allocation7 + $0x10] sm:$0xff]
    %v62 = vld [vmem:[#allocation7 + $0x18] sm:$0xff]
    %v63 = vunpack.c.0.s8 %v59
    %v64 = vunpack.c.1.s8 %v59
    %v65 = vunpack.c.2.s8 %v59
    %v66 = vunpack.c.3.s8 %v59
    %v67 = vunpack.c.0.s8 %v60
    %v68 = vunpack.c.1.s8 %v60
    %v69 = vunpack.c.2.s8 %v60
    %v70 = vunpack.c.3.s8 %v60
    %v71 = vunpack.c.0.s8 %v61
    %v72 = vunpack.c.1.s8 %v61
    %v73 = vunpack.c.2.s8 %v61
    %v74 = vunpack.c.3.s8 %v61
    %v75 = vunpack.c.0.s8 %v62
    %v76 = vunpack.c.1.s8 %v62
    %v77 = vunpack.c.2.s8 %v62
    %v78 = vunpack.c.3.s8 %v62
    %v79 = vcvt.s32.f32 %v63
    %v80 = vcvt.s32.f32 %v64
    %v81 = vcvt.s32.f32 %v65
    %v82 = vcvt.s32.f32 %v66
    %v83 = vcvt.s32.f32 %v67
    %v84 = vcvt.s32.f32 %v68
    %v85 = vcvt.s32.f32 %v69
    %v86 = vcvt.s32.f32 %v70
    %v87 = vcvt.s32.f32 %v71
    %v88 = vcvt.s32.f32 %v72
    %v89 = vcvt.s32.f32 %v73
    %v90 = vcvt.s32.f32 %v74
    %v91 = vcvt.s32.f32 %v75
    %v92 = vcvt.s32.f32 %v76
    %v93 = vcvt.s32.f32 %v77
    %v94 = vcvt.s32.f32 %v78
    %v95 = vld [vmem:[#allocation2] sm:$0xff]
    %v96 = vld [vmem:[#allocation2 + $0x8] sm:$0xff]
    %97 = vmatprep.subr.mxu0 0.0
    %98 = vmatpush1.msra.mxu0 %v94
    %99 = vmatprep.subr.mxu0 0.0
    %100 = vmatpush1.msra.mxu0 %v93
    %101 = vmatprep.subr.mxu0 0.0
    %102 = vmatpush1.msra.mxu0 %v92
    %103 = vmatprep.subr.mxu0 0.0
    %104 = vmatpush1.msra.mxu0 %v91
    %105 = vmatprep.subr.mxu0 0.0
    %106 = vmatpush1.msra.mxu0 %v90
    %107 = vmatprep.subr.mxu0 0.0
    %108 = vmatpush1.msra.mxu0 %v89
    %109 = vmatprep.subr.mxu0 0.0
    %110 = vmatpush1.msra.mxu0 %v88
    %111 = vmatprep.subr.mxu0 0.0
    %112 = vmatpush1.msra.mxu0 %v87
    %113 = vmatprep.subr.mxu0 0.0
    %114 = vmatpush1.msra.mxu0 %v86
    %115 = vmatprep.subr.mxu0 0.0
    %116 = vmatpush1.msra.mxu0 %v85
    %117 = vmatprep.subr.mxu0 0.0
    %118 = vmatpush1.msra.mxu0 %v84
    %119 = vmatprep.subr.mxu0 0.0
    %120 = vmatpush1.msra.mxu0 %v83
    %121 = vmatprep.subr.mxu0 0.0
    %122 = vmatpush1.msra.mxu0 %v82
    %123 = vmatprep.subr.mxu0 0.0
    %124 = vmatpush1.msra.mxu0 %v81
    %125 = vmatprep.subr.mxu0 0.0
    %126 = vmatpush1.msra.mxu0 %v80
    %127 = vmatprep.subr.mxu0 0.0
    %128 = vmatpush1.msra.mxu0 %v79
    %129 = vmatprep.subr.mxu0 0.0
    %130 = vmatpush2.msra.mxu0 0.0
    %131 = vmatprep.subr.mxu0 0.0
    %132 = vmatpush2.msra.mxu0 0.0
    %133 = vmatprep.subr.mxu0 0.0
    %134 = vmatpush2.msra.mxu0 0.0
    %135 = vmatprep.subr.mxu0 0.0
    %136 = vmatpush2.msra.mxu0 0.0
    %137 = vmatprep.subr.mxu0 0.0
    %138 = vmatpush2.msra.mxu0 0.0
    %139 = vmatprep.subr.mxu0 0.0
    %140 = vmatpush2.msra.mxu0 0.0
    %141 = vmatprep.subr.mxu0 0.0
    %142 = vmatpush2.msra.mxu0 0.0
    %143 = vmatprep.subr.mxu0 0.0
    %144 = vmatpush2.msra.mxu0 0.0
    %145 = vmatprep.subr.mxu0 0.0
    %146 = vmatpush2.msra.mxu0 0.0
    %147 = vmatprep.subr.mxu0 0.0
    %148 = vmatpush2.msra.mxu0 0.0
    %149 = vmatprep.subr.mxu0 0.0
    %150 = vmatpush2.msra.mxu0 0.0
    %151 = vmatprep.subr.mxu0 0.0
    %152 = vmatpush2.msra.mxu0 0.0
    %153 = vmatprep.subr.mxu0 0.0
    %154 = vmatpush2.msra.mxu0 0.0
    %155 = vmatprep.subr.mxu0 0.0
    %156 = vmatpush2.msra.mxu0 0.0
    %157 = vmatprep.subr.mxu0 0.0
    %158 = vmatpush2.msra.mxu0 0.0
    %159 = vmatprep.subr.mxu0 0.0
    %160 = vmatpush2.msra.mxu0 0.0
    %161 = vmatprep.mubr.f32.mxu0 0.0
    %162 = vmatmul.mubr.f32.gmra.mxu0 %v57
    %v163 = vpop.f32.mrf.mxu0
    %v164 = vadd.f32 0.0, %v163
    %v165 = vpop.f32.mrf.mxu0
    %166 = vmatprep.mubr.f32.mxu0 0.0
    %167 = vmatmul.mubr.f32.gmra.mxu0 %v58
    %v168 = vpop.f32.mrf.mxu0
    %v169 = vadd.f32 0.0, %v168
    %v170 = vpop.f32.mrf.mxu0
    %171 = vdwg.mxu0
    %v172 = vadd.f32 %v95, %v164
    %v173 = vadd.f32 %v96, %v169
    %174 = vst [vmem:[#allocation2] sm:$0xff] %v172
    %175 = vst [vmem:[#allocation2 + $0x8] sm:$0xff] %v173
    // Predicated region
    $region30: #{tpu_custom_call.1} parent=1 // pred_check
      %p176 = pneg %p47
    $region31: #{tpu_custom_call.1} parent=1 // pred_check_branch
      %178 = sbr.rel (%p176) target = $region33
    $region32: #{tpu_custom_call.1} parent=1 // pred_region
      %v179 = vld [vmem:[#allocation2] sm:$0xff]
      %v180 = vld [vmem:[#allocation2 + $0x8] sm:$0xff]
      %s181 = sld [smem:[#allocation3]]
      %v182 = vstv %s181
      %v183 = vmul.f32 %v179, %v182
      %v184 = vmul.f32 %v180, %v182
      %v185 = vld [vmem:[%s2] sm:$0x1]
      %v187 = vlaneseq
      %v188 = vshrl.u32 %v187, 7
      %v189 = vsub.s32 0, %v188
      %v190 = vrot.slane %v185, %v189
      %v192 = vadd.f32 %v183, %v190
      %v193 = vadd.f32 %v184, %v190
      %194 = vst [vmem:[#allocation9] sm:$0xff] %v192
      %195 = vst [vmem:[#allocation9 + $0x8] sm:$0xff] %v193
    $region33: #{tpu_custom_call.1} parent=1 // pred_fallthru
      _
    // Predicated region
    $region34: #{tpu_custom_call.1} parent=1 // pred_check
      _
    $region35: #{tpu_custom_call.1} parent=1 // pred_check_branch
      %197 = sbr.rel (0) target = $region37
    $region36: #{tpu_custom_call.1} parent=1 // pred_region
      %s199 = ssub.s32 256, 256
      %200 = vsyncadd [#allocation6], %s199
      %s201 = sshll.u32 [#allocation9], 4
      %s202 = int_to_ptr.vmem [resolvable:$true] %s201
      %207 = dma.vmem_to_hbm [thread:$0]  %s202, 256, %s4, [#allocation6], 128, 128, 8
    $region37: #{tpu_custom_call.1} parent=1 // pred_fallthru
      _
    // Predicated region
    $region38: #{tpu_custom_call.1} parent=1 // pred_check
      _
    $region39: #{tpu_custom_call.1} parent=1 // pred_check_branch
      %209 = sbr.rel (0) target = $region41
    $region40: #{tpu_custom_call.1} parent=1 // pred_region
      %210 = dma.done [#allocation6], 256
    $region41: #{tpu_custom_call.1} parent=1 // pred_fallthru
      _
    %211 = vsyncpa [#allocation5], 1
    %212 = vsyncpa [#allocation8], 1
    %213 = vsyncpa [#allocation6], 1

</llo_original>
